<compile_context>
chip_gen: v5e
topology: v5e:2x2
jax: 0.10.0
libtpu: 0.0.40
codegen_flags: <defaults>
</compile_context>

<pallas_src>
import functools

import jax
import jax.numpy as jnp
from jax.experimental import pallas as pl
from jax.experimental.pallas import tpu as pltpu

LANE = 128
SUBLANE = 8  # x is f32 at the kernel boundary -> 8-row sublane packing


def _round_up(n, m):
    return ((n + m - 1) // m) * m


def dqn_kernel(action_size, x_ref, w1_ref, b1_ref, w2_ref, b2_ref, w3_ref,
               b3_ref, o_ref):
    # In-kernel bf16 cast of the activations (VPU work hidden under DMA).
    x = x_ref[...].astype(jnp.bfloat16)
    # fc1 + relu (bf16 x bf16 -> f32 accumulate, f32 epilogue)
    h1 = jnp.dot(x, w1_ref[...], preferred_element_type=jnp.float32)
    h1 = jnp.maximum(h1 + b1_ref[...], 0.0).astype(jnp.bfloat16)
    # fc2 + relu
    h2 = jnp.dot(h1, w2_ref[...], preferred_element_type=jnp.float32)
    h2 = jnp.maximum(h2 + b2_ref[...], 0.0).astype(jnp.bfloat16)
    # fc3 (no activation); keep 128-lane MXU output, store only real columns.
    out = jnp.dot(h2, w3_ref[...], preferred_element_type=jnp.float32)
    out = out + b3_ref[...]
    o_ref[...] = out[:, :action_size].astype(o_ref.dtype)


def prepare_params(params):
    """Pad hidden/action dims to 128 lanes; weights -> bf16, biases f32 (1, N)."""
    w1, b1, w2, b2, w3, b3 = params
    S, H = w1.shape
    A = w3.shape[1]
    Hp = _round_up(H, LANE)
    Ap = _round_up(A, LANE)

    w1p = jnp.zeros((S, Hp), jnp.float32).at[:, :H].set(w1).astype(jnp.bfloat16)
    b1p = jnp.zeros((1, Hp), jnp.float32).at[:, :H].set(b1)
    w2p = jnp.zeros((Hp, Hp), jnp.float32).at[:H, :H].set(w2).astype(jnp.bfloat16)
    b2p = jnp.zeros((1, Hp), jnp.float32).at[:, :H].set(b2)
    w3p = jnp.zeros((Hp, Ap), jnp.float32).at[:H, :A].set(w3).astype(jnp.bfloat16)
    b3p = jnp.zeros((1, Ap), jnp.float32).at[:, :A].set(b3)
    return (w1p, b1p, w2p, b2p, w3p, b3p), A


def _choose_bm(B, block_bm):
    # Big tiles amortize the ~0.35us/step grid overhead, but keep at least two
    # grid steps for large batches so the "parallel" axis shards across both
    # TensorCores on v7x. Rounded to the f32 sublane multiple (8).
    half = _round_up(pl.cdiv(B, 2), SUBLANE)
    return max(SUBLANE, min(block_bm, half))


def dqn_forward(x, padded_params, action_size, *, block_bm=1024):
    w1, b1, w2, b2, w3, b3 = padded_params
    B, S = x.shape
    assert S == w1.shape[0], (S, w1.shape)
    Hp = w1.shape[1]
    Ap = w3.shape[1]

    bm = _choose_bm(B, block_bm)
    grid = (pl.cdiv(B, bm),)

    flops = 2 * B * (S * Hp + Hp * Hp + Hp * Ap)
    bytes_accessed = (
        x.size * 4 + B * action_size * 4
        + (w1.size + w2.size + w3.size) * 2
        + (b1.size + b2.size + b3.size) * 4
    )

    return pl.pallas_call(
        functools.partial(dqn_kernel, action_size),
        out_shape=jax.ShapeDtypeStruct((B, action_size), jnp.float32),
        grid_spec=pltpu.PrefetchScalarGridSpec(
            num_scalar_prefetch=0,
            grid=grid,
            in_specs=[
                pl.BlockSpec((bm, S), lambda i: (i, 0)),    # x: tiled over batch
                pl.BlockSpec((S, Hp), lambda i: (0, 0)),    # w1: VMEM-resident
                pl.BlockSpec((1, Hp), lambda i: (0, 0)),    # b1
                pl.BlockSpec((Hp, Hp), lambda i: (0, 0)),   # w2
                pl.BlockSpec((1, Hp), lambda i: (0, 0)),    # b2
                pl.BlockSpec((Hp, Ap), lambda i: (0, 0)),   # w3
                pl.BlockSpec((1, Ap), lambda i: (0, 0)),    # b3
            ],
            # Narrow output: last block dim == full array dim (action_size).
            out_specs=pl.BlockSpec((bm, action_size), lambda i: (i, 0)),
        ),
        compiler_params=pltpu.CompilerParams(
            dimension_semantics=("parallel",),
        ),
        cost_estimate=pl.CostEstimate(
            flops=flops, transcendentals=0, bytes_accessed=bytes_accessed),
    )(x, w1, b1, w2, b2, w3, b3)


def init_params(key, state_size, action_size, hidden_size=64):
    """Deterministic init matching nn.Linear + kaiming_normal_ on weights."""
    ks = jax.random.split(key, 6)

    def kaiming_normal(k, fan_in, fan_out):
        std = jnp.sqrt(2.0 / fan_in)
        return jax.random.normal(k, (fan_in, fan_out), jnp.float32) * std

    def bias_uniform(k, fan_in, fan_out):
        bound = 1.0 / jnp.sqrt(jnp.asarray(fan_in, jnp.float32))
        return jax.random.uniform(k, (1, fan_out), jnp.float32, -bound, bound)

    w1 = kaiming_normal(ks[0], state_size, hidden_size)
    b1 = bias_uniform(ks[1], state_size, hidden_size)
    w2 = kaiming_normal(ks[2], hidden_size, hidden_size)
    b2 = bias_uniform(ks[3], hidden_size, hidden_size)
    w3 = kaiming_normal(ks[4], hidden_size, action_size)
    b3 = bias_uniform(ks[5], hidden_size, action_size)
    return (w1, b1, w2, b2, w3, b3)


def dqn_reference_f32(x, params):
    w1, b1, w2, b2, w3, b3 = params
    h1 = jnp.maximum(x @ w1 + b1, 0.0)
    h2 = jnp.maximum(h1 @ w2 + b2, 0.0)
    return h2 @ w3 + b3


def dqn_reference_bf16(x, params):
    """Same bf16-operand / f32-accumulate recipe the kernel uses."""
    w1, b1, w2, b2, w3, b3 = params
    bf = jnp.bfloat16
    h1 = jnp.dot(x.astype(bf), w1.astype(bf), preferred_element_type=jnp.float32) + b1
    h1 = jnp.maximum(h1, 0.0).astype(bf)
    h2 = jnp.dot(h1, w2.astype(bf), preferred_element_type=jnp.float32) + b2
    h2 = jnp.maximum(h2, 0.0).astype(bf)
    return jnp.dot(h2, w3.astype(bf), preferred_element_type=jnp.float32) + b3


if __name__ == "__main__":
    batch = 2
    state_size = 8
    action_size = 4
    hidden_size = 64

    key = jax.random.PRNGKey(0)
    k_params, k_x = jax.random.split(key)
    params = init_params(k_params, state_size, action_size, hidden_size)
    x = jax.random.normal(k_x, (batch, state_size), jnp.float32)

    padded_params, act = prepare_params(params)
    out = dqn_forward(x, padded_params, act)
    out = jax.block_until_ready(out)

    assert out.shape == (batch, action_size), out.shape
    # Tight check vs a reference using the identical bf16-matmul recipe.
    ref_bf16 = dqn_reference_bf16(x, params)
    assert jnp.allclose(out, ref_bf16, atol=1e-3, rtol=1e-3), "mismatch vs bf16 reference"
    # Looser sanity check vs the full-f32 PyTorch-equivalent forward.
    ref_f32 = dqn_reference_f32(x, params)
    assert jnp.allclose(out, ref_f32, atol=5e-2, rtol=5e-2), "mismatch vs f32 reference"
    print("KERNEL_OK")
</pallas_src>

<mosaic_0001>
module attributes {stable_mosaic.version = 11 : i64} {
  func.func @dqn_kernel(%arg0: i32, %arg1: memref<8x8xf32, #tpu.memory_space<vmem>>, %arg2: memref<8x128xbf16, #tpu.memory_space<vmem>>, %arg3: memref<1x128xf32, #tpu.memory_space<vmem>>, %arg4: memref<128x128xbf16, #tpu.memory_space<vmem>>, %arg5: memref<1x128xf32, #tpu.memory_space<vmem>>, %arg6: memref<128x128xbf16, #tpu.memory_space<vmem>>, %arg7: memref<1x128xf32, #tpu.memory_space<vmem>>, %arg8: memref<8x4xf32, #tpu.memory_space<vmem>>) attributes {dimension_semantics = [#tpu.dimension_semantics<parallel>], iteration_bounds = array<i64: 1>, scalar_prefetch = 0 : i64, scratch_operands = 0 : i64, tpu.core_type = #tpu.core_type<tc>, window_params = [{transform_indices = @transform_0, window_bounds = array<i64: 8, 8>}, {pipeline_mode = #tpu.pipeline_mode<synchronous>, transform_indices = @transform_1, window_bounds = array<i64: 8, 128>}, {pipeline_mode = #tpu.pipeline_mode<synchronous>, transform_indices = @transform_2, window_bounds = array<i64: 1, 128>}, {pipeline_mode = #tpu.pipeline_mode<synchronous>, transform_indices = @transform_3, window_bounds = array<i64: 128, 128>}, {pipeline_mode = #tpu.pipeline_mode<synchronous>, transform_indices = @transform_4, window_bounds = array<i64: 1, 128>}, {pipeline_mode = #tpu.pipeline_mode<synchronous>, transform_indices = @transform_5, window_bounds = array<i64: 128, 128>}, {pipeline_mode = #tpu.pipeline_mode<synchronous>, transform_indices = @transform_6, window_bounds = array<i64: 1, 128>}, {transform_indices = @transform_7, window_bounds = array<i64: 8, 4>}]} {
    %c0 = arith.constant 0 : index
    %c0_0 = arith.constant 0 : index
    %0 = vector.load %arg1[%c0, %c0_0] : memref<8x8xf32, #tpu.memory_space<vmem>>, vector<8x8xf32>
    %1 = arith.truncf %0 : vector<8x8xf32> to vector<8x8xbf16>
    %c0_1 = arith.constant 0 : index
    %c0_2 = arith.constant 0 : index
    %2 = vector.load %arg2[%c0_1, %c0_2] : memref<8x128xbf16, #tpu.memory_space<vmem>>, vector<8x128xbf16>
    %cst = arith.constant dense<0.000000e+00> : vector<8x128xf32>
    %3 = tpu.matmul %1, %2, %cst {dimension_numbers = #tpu.dot_dimension_numbers<[1], [0], [0], [1], [0, 0, 1, 1], [], []>} : vector<8x8xbf16>, vector<8x128xbf16>, vector<8x128xf32> -> vector<8x128xf32>
    %c0_3 = arith.constant 0 : index
    %c0_4 = arith.constant 0 : index
    %4 = vector.load %arg3[%c0_3, %c0_4] : memref<1x128xf32, #tpu.memory_space<vmem>>, vector<1x128xf32>
    %5 = vector.broadcast %4 : vector<1x128xf32> to vector<8x128xf32>
    %6 = arith.addf %3, %5 : vector<8x128xf32>
    %cst_5 = arith.constant 0.000000e+00 : f32
    %7 = vector.broadcast %cst_5 : f32 to vector<8x128xf32>
    %8 = arith.maximumf %6, %7 : vector<8x128xf32>
    %9 = arith.truncf %8 : vector<8x128xf32> to vector<8x128xbf16>
    %c0_6 = arith.constant 0 : index
    %c0_7 = arith.constant 0 : index
    %10 = vector.load %arg4[%c0_6, %c0_7] : memref<128x128xbf16, #tpu.memory_space<vmem>>, vector<128x128xbf16>
    %cst_8 = arith.constant dense<0.000000e+00> : vector<8x128xf32>
    %11 = tpu.matmul %9, %10, %cst_8 {dimension_numbers = #tpu.dot_dimension_numbers<[1], [0], [0], [1], [0, 0, 1, 1], [], []>} : vector<8x128xbf16>, vector<128x128xbf16>, vector<8x128xf32> -> vector<8x128xf32>
    %c0_9 = arith.constant 0 : index
    %c0_10 = arith.constant 0 : index
    %12 = vector.load %arg5[%c0_9, %c0_10] : memref<1x128xf32, #tpu.memory_space<vmem>>, vector<1x128xf32>
    %13 = vector.broadcast %12 : vector<1x128xf32> to vector<8x128xf32>
    %14 = arith.addf %11, %13 : vector<8x128xf32>
    %cst_11 = arith.constant 0.000000e+00 : f32
    %15 = vector.broadcast %cst_11 : f32 to vector<8x128xf32>
    %16 = arith.maximumf %14, %15 : vector<8x128xf32>
    %17 = arith.truncf %16 : vector<8x128xf32> to vector<8x128xbf16>
    %c0_12 = arith.constant 0 : index
    %c0_13 = arith.constant 0 : index
    %18 = vector.load %arg6[%c0_12, %c0_13] : memref<128x128xbf16, #tpu.memory_space<vmem>>, vector<128x128xbf16>
    %cst_14 = arith.constant dense<0.000000e+00> : vector<8x128xf32>
    %19 = tpu.matmul %17, %18, %cst_14 {dimension_numbers = #tpu.dot_dimension_numbers<[1], [0], [0], [1], [0, 0, 1, 1], [], []>} : vector<8x128xbf16>, vector<128x128xbf16>, vector<8x128xf32> -> vector<8x128xf32>
    %c0_15 = arith.constant 0 : index
    %c0_16 = arith.constant 0 : index
    %20 = vector.load %arg7[%c0_15, %c0_16] : memref<1x128xf32, #tpu.memory_space<vmem>>, vector<1x128xf32>
    %21 = vector.broadcast %20 : vector<1x128xf32> to vector<8x128xf32>
    %22 = arith.addf %19, %21 : vector<8x128xf32>
    %23 = vector.extract_strided_slice %22 {offsets = [0, 0], sizes = [8, 4], strides = [1, 1]} : vector<8x128xf32> to vector<8x4xf32>
    %c0_17 = arith.constant 0 : index
    %c0_18 = arith.constant 0 : index
    %24 = vector.load %arg8[%c0_17, %c0_18] : memref<8x4xf32, #tpu.memory_space<vmem>>, vector<8x4xf32>
    tpu.vector_store %arg8[%c0_17, %c0_18], %23 {strides = array<i32>} : memref<8x4xf32, #tpu.memory_space<vmem>>, vector<8x4xf32>,
    return
  }
  func.func @transform_0(%arg0: i32) -> (i32, i32) {
    %c0_i32 = arith.constant 0 : i32
    %c0_i32_0 = arith.constant 0 : i32
    return %arg0, %c0_i32 : i32, i32
  }
  func.func @transform_1(%arg0: i32) -> (i32, i32) {
    %c0_i32 = arith.constant 0 : i32
    %c0_i32_0 = arith.constant 0 : i32
    %c0_i32_1 = arith.constant 0 : i32
    return %c0_i32, %c0_i32_0 : i32, i32
  }
  func.func @transform_2(%arg0: i32) -> (i32, i32) {
    %c0_i32 = arith.constant 0 : i32
    %c0_i32_0 = arith.constant 0 : i32
    %c0_i32_1 = arith.constant 0 : i32
    return %c0_i32, %c0_i32_0 : i32, i32
  }
  func.func @transform_3(%arg0: i32) -> (i32, i32) {
    %c0_i32 = arith.constant 0 : i32
    %c0_i32_0 = arith.constant 0 : i32
    %c0_i32_1 = arith.constant 0 : i32
    return %c0_i32, %c0_i32_0 : i32, i32
  }
  func.func @transform_4(%arg0: i32) -> (i32, i32) {
    %c0_i32 = arith.constant 0 : i32
    %c0_i32_0 = arith.constant 0 : i32
    %c0_i32_1 = arith.constant 0 : i32
    return %c0_i32, %c0_i32_0 : i32, i32
  }
  func.func @transform_5(%arg0: i32) -> (i32, i32) {
    %c0_i32 = arith.constant 0 : i32
    %c0_i32_0 = arith.constant 0 : i32
    %c0_i32_1 = arith.constant 0 : i32
    return %c0_i32, %c0_i32_0 : i32, i32
  }
  func.func @transform_6(%arg0: i32) -> (i32, i32) {
    %c0_i32 = arith.constant 0 : i32
    %c0_i32_0 = arith.constant 0 : i32
    %c0_i32_1 = arith.constant 0 : i32
    return %c0_i32, %c0_i32_0 : i32, i32
  }
  func.func @transform_7(%arg0: i32) -> (i32, i32) {
    %c0_i32 = arith.constant 0 : i32
    %c0_i32_0 = arith.constant 0 : i32
    return %arg0, %c0_i32 : i32, i32
  }
}

</mosaic_0001>

<llo_original>
// kernel: tpu_custom_call.1
$region0: #{tpu_custom_call.1}
  #allocation0 [shape = 'u32[]', space=smem, size = 0x4, offset = 0x4, fixed_abs, tag = 'smem constant byte address 0x4 - core index']
  #allocation1 [shape = 'u32[72,128]{1,0:T(1,128)}', space=vmem, size = 0x9000, scoped, tag = 'internal scratch']
  %s0 = inlined_call_operand.hbm [shape: f32[2,8], index: 0, kind: input, shape index: {}]
  %s1 = inlined_call_operand.hbm [shape: bf16[8,128], index: 1, kind: input, shape index: {}]
  %s2 = inlined_call_operand.vmem [shape: f32[1,128], index: 2, kind: input, shape index: {}]
  %s3 = inlined_call_operand.hbm [shape: bf16[128,128], index: 3, kind: input, shape index: {}]
  %s4 = inlined_call_operand.vmem [shape: f32[1,128], index: 4, kind: input, shape index: {}]
  %s5 = inlined_call_operand.hbm [shape: bf16[128,128], index: 5, kind: input, shape index: {}]
  %s6 = inlined_call_operand.vmem [shape: f32[1,128], index: 6, kind: input, shape index: {}]
  %s7 = inlined_call_operand.hbm [shape: f32[2,4], index: 7, kind: output, shape index: {}]
  %s8 = sld [smem:[#allocation0]]
  $region54: #{tpu_custom_call.1} parent=0
    _
  %s10 = ssub.s32 1, %s8
  %s11 = scalar_select 0, %s10, %s8
  $region1: #{tpu_custom_call.1} parent=0
    #allocation2 [shape = 'u8[4096]{0}', space=vmem, size = 0x1000, scoped, tag = 'input window, operand 0, single buffered']
    #allocation3 [shape = 's32[1]{0}', space=sflag, size = 0x4, scoped, tag = 'scoped memory for tpu_custom_call.1']
    #allocation4 [shape = 's32[1]{0}', space=sflag, size = 0x4, scoped, tag = 'scoped memory for tpu_custom_call.1']
    #allocation5 [shape = 'u8[2048]{0}', space=vmem, size = 0x800, scoped, tag = 'input window, operand 1, single buffered']
    #allocation6 [shape = 's32[1]{0}', space=sflag, size = 0x4, scoped, tag = 'scoped memory for tpu_custom_call.1']
    #allocation7 [shape = 'u8[32768]{0}', space=vmem, size = 0x8000, scoped, tag = 'input window, operand 3, single buffered']
    #allocation8 [shape = 'u8[32768]{0}', space=vmem, size = 0x8000, scoped, tag = 'input window, operand 5, single buffered']
    #allocation9 [shape = 's32[1]{0}', space=sflag, size = 0x4, scoped, tag = 'scoped memory for tpu_custom_call.1']
    #allocation10 [shape = 'u8[4096]{0}', space=vmem, size = 0x1000, scoped, tag = 'output window, operand 0, single buffered']
    %12 = vsyncpa [#allocation3], 0
    %13 = vsyncpa [#allocation6], 0
    %14 = vsyncpa [#allocation9], 0
    %15 = vsyncpa [#allocation4], 0
    // Predicated region
    $region2: #{tpu_custom_call.1} parent=1 // pred_check
      _
    $region3: #{tpu_custom_call.1} parent=1 // pred_check_branch
      %17 = sbr.rel (0) target = $region5
    $region4: #{tpu_custom_call.1} parent=1 // pred_region
      %19 = vsyncadd [#allocation3], 96
      %s20 = sshll.u32 %s0, 4
      %s21 = int_to_ptr.hbm [resolvable:$true] %s20
      %s22 = sshll.u32 [#allocation2], 4
      %s23 = int_to_ptr.vmem [resolvable:$true] %s22
      %28 = dma.hbm_to_vmem [thread:$0]  %s21, 32, %s23, [#allocation3], 32, 32, 2
    $region5: #{tpu_custom_call.1} parent=1 // pred_fallthru
      _
    // Predicated region
    $region6: #{tpu_custom_call.1} parent=1 // pred_check
      _
    $region7: #{tpu_custom_call.1} parent=1 // pred_check_branch
      %30 = sbr.rel (0) target = $region9
    $region8: #{tpu_custom_call.1} parent=1 // pred_region
      %32 = vsyncadd [#allocation6], 0
      %s34 = sshll.u32 %s1, 4
      %s35 = int_to_ptr.hbm [resolvable:$true] %s34
      %s36 = sshll.u32 [#allocation5], 4
      %s37 = int_to_ptr.vmem [resolvable:$true] %s36
      %39 = dma.hbm_to_vmem [thread:$0]  %s35, 64, %s37, [#allocation6]
    $region9: #{tpu_custom_call.1} parent=1 // pred_fallthru
      _
    // Predicated region
    $region10: #{tpu_custom_call.1} parent=1 // pred_check
      _
    $region11: #{tpu_custom_call.1} parent=1 // pred_check_branch
      %41 = sbr.rel (0) target = $region13
    $region12: #{tpu_custom_call.1} parent=1 // pred_region
      _
    $region13: #{tpu_custom_call.1} parent=1 // pred_fallthru
      _
    // Predicated region
    $region14: #{tpu_custom_call.1} parent=1 // pred_check
      _
    $region15: #{tpu_custom_call.1} parent=1 // pred_check_branch
      %43 = sbr.rel (0) target = $region17
    $region16: #{tpu_custom_call.1} parent=1 // pred_region
      %45 = vsyncadd [#allocation6], 0
      %s46 = sshll.u32 %s3, 4
      %s47 = int_to_ptr.hbm [resolvable:$true] %s46
      %s48 = sshll.u32 [#allocation7], 4
      %s49 = int_to_ptr.vmem [resolvable:$true] %s48
      %54 = dma.hbm_to_vmem [thread:$0]  %s47, 1024, %s49, [#allocation6], 64, 64, 4
    $region17: #{tpu_custom_call.1} parent=1 // pred_fallthru
      _
    // Predicated region
    $region18: #{tpu_custom_call.1} parent=1 // pred_check
      _
    $region19: #{tpu_custom_call.1} parent=1 // pred_check_branch
      %56 = sbr.rel (0) target = $region21
    $region20: #{tpu_custom_call.1} parent=1 // pred_region
      _
    $region21: #{tpu_custom_call.1} parent=1 // pred_fallthru
      _
    // Predicated region
    $region22: #{tpu_custom_call.1} parent=1 // pred_check
      _
    $region23: #{tpu_custom_call.1} parent=1 // pred_check_branch
      %58 = sbr.rel (0) target = $region25
    $region24: #{tpu_custom_call.1} parent=1 // pred_region
      %60 = vsyncadd [#allocation9], 0
      %s61 = sshll.u32 %s5, 4
      %s62 = int_to_ptr.hbm [resolvable:$true] %s61
      %s63 = sshll.u32 [#allocation8], 4
      %s64 = int_to_ptr.vmem [resolvable:$true] %s63
      %69 = dma.hbm_to_vmem [thread:$0]  %s62, 1024, %s64, [#allocation9], 64, 64, 4
    $region25: #{tpu_custom_call.1} parent=1 // pred_fallthru
      _
    // Predicated region
    $region26: #{tpu_custom_call.1} parent=1 // pred_check
      _
    $region27: #{tpu_custom_call.1} parent=1 // pred_check_branch
      %71 = sbr.rel (0) target = $region29
    $region28: #{tpu_custom_call.1} parent=1 // pred_region
      _
    $region29: #{tpu_custom_call.1} parent=1 // pred_fallthru
      _
    // Predicated region
    $region30: #{tpu_custom_call.1} parent=1 // pred_check
      _
    $region31: #{tpu_custom_call.1} parent=1 // pred_check_branch
      %73 = sbr.rel (0) target = $region33
    $region32: #{tpu_custom_call.1} parent=1 // pred_region
      %75 = dma.done [#allocation3], 128
    $region33: #{tpu_custom_call.1} parent=1 // pred_fallthru
      _
    // Predicated region
    $region34: #{tpu_custom_call.1} parent=1 // pred_check
      _
    $region35: #{tpu_custom_call.1} parent=1 // pred_check_branch
      %77 = sbr.rel (0) target = $region37
    $region36: #{tpu_custom_call.1} parent=1 // pred_region
      %79 = dma.done [#allocation6], 64
    $region37: #{tpu_custom_call.1} parent=1 // pred_fallthru
      _
    // Predicated region
    $region38: #{tpu_custom_call.1} parent=1 // pred_check
      _
    $region39: #{tpu_custom_call.1} parent=1 // pred_check_branch
      %81 = sbr.rel (0) target = $region41
    $region40: #{tpu_custom_call.1} parent=1 // pred_region
      %83 = dma.done [#allocation6], 1024
    $region41: #{tpu_custom_call.1} parent=1 // pred_fallthru
      _
    // Predicated region
    $region42: #{tpu_custom_call.1} parent=1 // pred_check
      _
    $region43: #{tpu_custom_call.1} parent=1 // pred_check_branch
      %85 = sbr.rel (0) target = $region45
    $region44: #{tpu_custom_call.1} parent=1 // pred_region
      %87 = dma.done [#allocation9], 1024
    $region45: #{tpu_custom_call.1} parent=1 // pred_fallthru
      _
    %v89 = vld [vmem:[#allocation2] sm:$0xff]
    %v90 = vpack.c.bf16 %v89, %v89
    %v91 = vld [vmem:[#allocation5] sm:$0xf]
    %v92 = vld [vmem:[%s2] sm:$0x1]
    %v94 = vperm.slane %v92, 0
    %vm96 = vcmask 64512
    %v98 = vsel %vm96, %v90, 0
    %vm100 = vcmask 1043456
    %v102 = vsel %vm100, %v91, 0
    %104 = vmatpush.bf16.msra.mxu0 0
    %105 = vmatpush.bf16.msra.mxu0 0
    %106 = vmatpush.bf16.msra.mxu0 0
    %107 = vmatpush.bf16.msra.mxu0 0
    %108 = vmatpush.bf16.msra.mxu0 0
    %109 = vmatpush.bf16.msra.mxu0 0
    %110 = vmatpush.bf16.msra.mxu0 0
    %111 = vmatpush.bf16.msra.mxu0 %v102
    %112 = vmatmul.bf16.gmra.mxu0 %v98
    %v113 = vpop.f32.mrf.mxu0
    %v114 = vadd.f32 %v94, %v113
    %v115 = vpop.f32.mrf.mxu0
    %116 = vdwg.mxu0
    %v117 = vmax.f32 %v114, 0.0
    %v118 = vpack.c.bf16 %v117, %v117
    %v119 = vld [vmem:[#allocation7] sm:$0xf]
    %v120 = vld [vmem:[#allocation7 + $0x4] sm:$0xf]
    %v121 = vld [vmem:[#allocation7 + $0x8] sm:$0xf]
    %v122 = vld [vmem:[#allocation7 + $0xc] sm:$0xf]
    %v123 = vld [vmem:[#allocation7 + $0x10] sm:$0xf]
    %v124 = vld [vmem:[#allocation7 + $0x14] sm:$0xf]
    %v125 = vld [vmem:[#allocation7 + $0x18] sm:$0xf]
    %v126 = vld [vmem:[#allocation7 + $0x1c] sm:$0xf]
    %v127 = vld [vmem:[#allocation7 + $0x20] sm:$0xf]
    %v128 = vld [vmem:[#allocation7 + $0x24] sm:$0xf]
    %v129 = vld [vmem:[#allocation7 + $0x28] sm:$0xf]
    %v130 = vld [vmem:[#allocation7 + $0x2c] sm:$0xf]
    %v131 = vld [vmem:[#allocation7 + $0x30] sm:$0xf]
    %v132 = vld [vmem:[#allocation7 + $0x34] sm:$0xf]
    %v133 = vld [vmem:[#allocation7 + $0x38] sm:$0xf]
    %v134 = vld [vmem:[#allocation7 + $0x3c] sm:$0xf]
    %v135 = vld [vmem:[%s4] sm:$0x1]
    %v137 = vperm.slane %v135, 0
    %v155 = vunpack.c.l.b16 %v119
    %v156 = vunpack.c.l.b16 %v120
    %v157 = vunpack.c.l.b16 %v121
    %v158 = vunpack.c.l.b16 %v122
    %v159 = vunpack.c.l.b16 %v123
    %v160 = vunpack.c.l.b16 %v124
    %v161 = vunpack.c.l.b16 %v125
    %v162 = vunpack.c.l.b16 %v126
    %v163 = vunpack.c.l.b16 %v127
    %v164 = vunpack.c.l.b16 %v128
    %v165 = vunpack.c.l.b16 %v129
    %v166 = vunpack.c.l.b16 %v130
    %v167 = vunpack.c.l.b16 %v131
    %v168 = vunpack.c.l.b16 %v132
    %v169 = vunpack.c.l.b16 %v133
    %v170 = vunpack.c.l.b16 %v134
    %v171 = vpack.c.b16 %v156, %v155
    %v172 = vpack.c.b16 %v158, %v157
    %v173 = vpack.c.b16 %v160, %v159
    %v174 = vpack.c.b16 %v162, %v161
    %v175 = vpack.c.b16 %v164, %v163
    %v176 = vpack.c.b16 %v166, %v165
    %v177 = vpack.c.b16 %v168, %v167
    %v178 = vpack.c.b16 %v170, %v169
    %187 = vmatpush.bf16.msra.mxu0 %v178
    %188 = vmatpush.bf16.msra.mxu0 %v177
    %189 = vmatpush.bf16.msra.mxu0 %v176
    %190 = vmatpush.bf16.msra.mxu0 %v175
    %191 = vmatpush.bf16.msra.mxu0 %v174
    %192 = vmatpush.bf16.msra.mxu0 %v173
    %193 = vmatpush.bf16.msra.mxu0 %v172
    %194 = vmatpush.bf16.msra.mxu0 %v171
    %195 = vmatmul.bf16.gmra.mxu0 %v118
    %v196 = vpop.f32.mrf.mxu0
    %v197 = vadd.f32 %v137, %v196
    %v198 = vpop.f32.mrf.mxu0
    %199 = vdwg.mxu0
    %v200 = vmax.f32 %v197, 0.0
    %v201 = vpack.c.bf16 %v200, %v200
    %v202 = vld [vmem:[#allocation8] sm:$0xf]
    %v203 = vld [vmem:[#allocation8 + $0x4] sm:$0xf]
    %v204 = vld [vmem:[#allocation8 + $0x8] sm:$0xf]
    %v205 = vld [vmem:[#allocation8 + $0xc] sm:$0xf]
    %v206 = vld [vmem:[#allocation8 + $0x10] sm:$0xf]
    %v207 = vld [vmem:[#allocation8 + $0x14] sm:$0xf]
    %v208 = vld [vmem:[#allocation8 + $0x18] sm:$0xf]
    %v209 = vld [vmem:[#allocation8 + $0x1c] sm:$0xf]
    %v210 = vld [vmem:[#allocation8 + $0x20] sm:$0xf]
    %v211 = vld [vmem:[#allocation8 + $0x24] sm:$0xf]
    %v212 = vld [vmem:[#allocation8 + $0x28] sm:$0xf]
    %v213 = vld [vmem:[#allocation8 + $0x2c] sm:$0xf]
    %v214 = vld [vmem:[#allocation8 + $0x30] sm:$0xf]
    %v215 = vld [vmem:[#allocation8 + $0x34] sm:$0xf]
    %v216 = vld [vmem:[#allocation8 + $0x38] sm:$0xf]
    %v217 = vld [vmem:[#allocation8 + $0x3c] sm:$0xf]
    %v218 = vld [vmem:[%s6] sm:$0x1]
    %v220 = vperm.slane %v218, 0
    %v238 = vunpack.c.l.b16 %v202
    %v239 = vunpack.c.l.b16 %v203
    %v240 = vunpack.c.l.b16 %v204
    %v241 = vunpack.c.l.b16 %v205
    %v242 = vunpack.c.l.b16 %v206
    %v243 = vunpack.c.l.b16 %v207
    %v244 = vunpack.c.l.b16 %v208
    %v245 = vunpack.c.l.b16 %v209
    %v246 = vunpack.c.l.b16 %v210
    %v247 = vunpack.c.l.b16 %v211
    %v248 = vunpack.c.l.b16 %v212
    %v249 = vunpack.c.l.b16 %v213
    %v250 = vunpack.c.l.b16 %v214
    %v251 = vunpack.c.l.b16 %v215
    %v252 = vunpack.c.l.b16 %v216
    %v253 = vunpack.c.l.b16 %v217
    %v254 = vpack.c.b16 %v239, %v238
    %v255 = vpack.c.b16 %v241, %v240
    %v256 = vpack.c.b16 %v243, %v242
    %v257 = vpack.c.b16 %v245, %v244
    %v258 = vpack.c.b16 %v247, %v246
    %v259 = vpack.c.b16 %v249, %v248
    %v260 = vpack.c.b16 %v251, %v250
    %v261 = vpack.c.b16 %v253, %v252
    %270 = vmatpush.bf16.msra.mxu0 %v261
    %271 = vmatpush.bf16.msra.mxu0 %v260
    %272 = vmatpush.bf16.msra.mxu0 %v259
    %273 = vmatpush.bf16.msra.mxu0 %v258
    %274 = vmatpush.bf16.msra.mxu0 %v257
    %275 = vmatpush.bf16.msra.mxu0 %v256
    %276 = vmatpush.bf16.msra.mxu0 %v255
    %277 = vmatpush.bf16.msra.mxu0 %v254
    %278 = vmatmul.bf16.gmra.mxu0 %v201
    %v279 = vpop.f32.mrf.mxu0
    %v280 = vadd.f32 %v220, %v279
    %v281 = vpop.f32.mrf.mxu0
    %282 = vdwg.mxu0
    %vm283 = vcmask 31744
    %284 = vst.msk [vmem:[#allocation10] sm:$0xff] %vm283, %v280
    // Predicated region
    $region46: #{tpu_custom_call.1} parent=1 // pred_check
      _
    $region47: #{tpu_custom_call.1} parent=1 // pred_check_branch
      %286 = sbr.rel (0) target = $region49
    $region48: #{tpu_custom_call.1} parent=1 // pred_region
      %288 = vsyncadd [#allocation4], 96
      %s289 = sshll.u32 [#allocation10], 4
      %s290 = int_to_ptr.vmem [resolvable:$true] %s289
      %s291 = sshll.u32 %s7, 4
      %s292 = int_to_ptr.hbm [resolvable:$true] %s291
      %297 = dma.vmem_to_hbm [thread:$0]  %s290, 32, %s292, [#allocation4], 32, 32, 2
    $region49: #{tpu_custom_call.1} parent=1 // pred_fallthru
      _
    // Predicated region
    $region50: #{tpu_custom_call.1} parent=1 // pred_check
      _
    $region51: #{tpu_custom_call.1} parent=1 // pred_check_branch
      %299 = sbr.rel (0) target = $region53
    $region52: #{tpu_custom_call.1} parent=1 // pred_region
      %301 = dma.done [#allocation4], 128
    $region53: #{tpu_custom_call.1} parent=1 // pred_fallthru
      _
    %302 = vsyncpa [#allocation3], 1
    %303 = vsyncpa [#allocation6], 1
    %304 = vsyncpa [#allocation9], 1
    %305 = vsyncpa [#allocation4], 1

</llo_original>
